<compile_context>
chip_gen: v7x
topology: tpu7x:2x2x1
jax: 0.10.0
libtpu: 0.0.40
codegen_flags: <defaults>
</compile_context>

<pallas_src>
import jax
import jax.numpy as jnp
import numpy as np
from jax.experimental import pallas as pl
from jax.experimental.pallas import tpu as pltpu

INPUT_DIM = 4          # risk_vector_dim
OUTCOME_DIM = 3        # outcome_dim
HIDDEN_DIM = 16        # hidden_dim
OUTPUT_DIM = 8         # output_dim
MEMORY_SIZE = 20       # memory_size
PERF_IN = MEMORY_SIZE * 3            # 60
X_DIM = INPUT_DIM + OUTCOME_DIM      # 7
LN_EPS = 1e-5

TILE_B = 8             # one full sublane group per grid step

# ---- fused-stage output widths ----------------------------------------------
N0 = 4 * HIDDEN_DIM + 32             # 96: [lstm0 gates | perf-encoder layer-1]
N1 = 4 * HIDDEN_DIM + HIDDEN_DIM     # 80: [lstm1 gates | perf-encoder layer-2]

# ---- packed slab layout (row offsets are multiples of 8 where it matters so -
# ---- every in-kernel slice is tile-friendly; all column slices start at 0) --
R_WX = 0          # rows   0:  7  cols 0:96   w_ih0  in cols 0:64   (x  split-K)
R_WP = 8          # rows   8: 68  cols 0:96   w_pe1  in cols 64:96  (perf split-K)
R_WH0 = 72        # rows  72: 88  cols 0:80   w_ih1  in cols 0:64   (h0 split-K)
R_WP1 = 88        # rows  88:120  cols 0:80   w_pe2  in cols 64:80  (p1 split-K)
R_WHEAD = 120     # rows 120:152  cols 0:16   [w_mu | w_s1]  (h1 / perf_ctx split-K)
R_WS2 = 152       # rows 152:160  cols 0:8    w_s2
B_BASE = 160      # rows 160:168  one [8,128] bias tile
W_SLAB_ROWS = 168
# bias rows within the bias tile
B_ROW_S0, B_ROW_S1, B_ROW_HEAD, B_ROW_S2, B_ROW_LNG, B_ROW_LNB = range(6)


def _softplus(x):
    # matches torch.nn.Softplus(beta=1, threshold=20)
    return jnp.where(x > 20.0, x, jnp.log1p(jnp.exp(jnp.minimum(x, 20.0))))


def _mrms_kernel(x_ref, perf_ref, w_ref, out_ref):
    H = HIDDEN_DIM
    x = x_ref[...]                        # [TILE_B, 7]   = [risk | outcome]
    perf = perf_ref[...]                  # [1, 60]       shared performance memory
    b = w_ref[B_BASE:B_BASE + 8, :]       # [8, 128] bias tile: one vreg

    def lstm_cell_zero_state(gates):
        # seq_len == 1 with zero initial (h, c): h_prev@W_hh == 0, f*c_prev == 0.
        # PyTorch gate order i, f, g, o.  One sigmoid pass over the whole gate
        # vreg covers i and o (the f lanes are computed but unused — free).
        sg = jax.nn.sigmoid(gates)                       # [TB, 64]
        g = jnp.tanh(gates[:, 2 * H:3 * H])              # [TB, 16]
        c = sg[:, 0:H] * g
        return sg[:, 3 * H:4 * H] * jnp.tanh(c)          # h   [TB, 16]

    # ---- stage 0: split-K block-diag = (x @ w_ih0 | perf @ w_pe1) -----------
    # two adjacent, independent MXU issues accumulating into one result
    # (the [1,96] perf term broadcasts over the batch in the add — this is the
    # module's shared performance context, no [B,60] operand is materialized)
    s0 = (jnp.dot(x, w_ref[R_WX:R_WX + X_DIM, 0:N0],
                  preferred_element_type=jnp.float32)
          + jnp.dot(perf, w_ref[R_WP:R_WP + PERF_IN, 0:N0],
                    preferred_element_type=jnp.float32)
          + b[B_ROW_S0:B_ROW_S0 + 1, 0:N0])              # [TB, 96]
    h0 = lstm_cell_zero_state(s0[:, 0:4 * H])            # LSTM layer 0   [TB, 16]
    p1 = jnp.maximum(s0[:, 4 * H:N0], 0.0)               # perf enc L1    [TB, 32]
    # (inter-layer LSTM dropout(0.1) and encoder Dropout(0.1) are eval no-ops)

    # ---- stage 1: split-K block-diag = (h0 @ w_ih1 | p1 @ w_pe2) ------------
    s1 = (jnp.dot(h0, w_ref[R_WH0:R_WH0 + H, 0:N1],
                  preferred_element_type=jnp.float32)
          + jnp.dot(p1, w_ref[R_WP1:R_WP1 + 32, 0:N1],
                    preferred_element_type=jnp.float32)
          + b[B_ROW_S1:B_ROW_S1 + 1, 0:N1])              # [TB, 80]
    h1 = lstm_cell_zero_state(s1[:, 0:4 * H])            # LSTM layer 1   [TB, 16]
    perf_ctx = jnp.maximum(s1[:, 4 * H:N1], 0.0)         # perf context   [TB, 16]

    # ---- head: fused (mu | sigma) first linear as an adjacent split-K pair --
    head = (jnp.dot(h1, w_ref[R_WHEAD:R_WHEAD + H, 0:2 * OUTPUT_DIM],
                    preferred_element_type=jnp.float32)
            + jnp.dot(perf_ctx,
                      w_ref[R_WHEAD + H:R_WHEAD + 2 * H, 0:2 * OUTPUT_DIM],
                      preferred_element_type=jnp.float32)
            + b[B_ROW_HEAD:B_ROW_HEAD + 1, 0:2 * OUTPUT_DIM])   # [TB, 16]
    mu_lin = head[:, 0:OUTPUT_DIM]
    s1_pre = head[:, OUTPUT_DIM:2 * OUTPUT_DIM]

    # mu head: LayerNorm(8) -> Tanh
    mean = jnp.mean(mu_lin, axis=-1, keepdims=True)
    var = jnp.mean((mu_lin - mean) ** 2, axis=-1, keepdims=True)
    mu = jnp.tanh((mu_lin - mean) * jax.lax.rsqrt(var + LN_EPS)
                  * b[B_ROW_LNG:B_ROW_LNG + 1, 0:OUTPUT_DIM]
                  + b[B_ROW_LNB:B_ROW_LNB + 1, 0:OUTPUT_DIM])

    # sigma head: Softplus -> Linear(8,8) -> Softplus, then +1e-6
    s1a = _softplus(s1_pre)
    sigma = _softplus(
        jnp.dot(s1a, w_ref[R_WS2:R_WS2 + OUTPUT_DIM, 0:OUTPUT_DIM],
                preferred_element_type=jnp.float32)
        + b[B_ROW_S2:B_ROW_S2 + 1, 0:OUTPUT_DIM]) + 1e-6

    # single merged output store: lanes 0:8 = mu, lanes 8:16 = sigma
    out_ref[...] = jnp.concatenate([mu, sigma], axis=-1)


def init_params(key):
    """Deterministic PyTorch-like init (uniform(-k, k)); LayerNorm = ones/zeros.
    Returns the UNFUSED param dict (used by the reference and by pack_params)."""
    ks = jax.random.split(key, 16)
    H, IN, OUT = HIDDEN_DIM, X_DIM, OUTPUT_DIM

    def uni(k, shape, fan_in):
        bound = 1.0 / np.sqrt(fan_in)
        return jax.random.uniform(k, shape, jnp.float32, -bound, bound)

    p = {}
    # LSTM layer 0 (pre-transposed to [in, 4H]); biases pre-summed (b_ih + b_hh).
    p["w_ih0"] = uni(ks[0], (IN, 4 * H), H)
    p["w_hh0"] = uni(ks[1], (H, 4 * H), H)      # only the reference needs these:
    p["b0"] = uni(ks[2], (1, 4 * H), H) + uni(ks[3], (1, 4 * H), H)
    # LSTM layer 1
    p["w_ih1"] = uni(ks[4], (H, 4 * H), H)
    p["w_hh1"] = uni(ks[5], (H, 4 * H), H)      # zero h_prev makes them no-ops
    p["b1"] = uni(ks[6], (1, 4 * H), H) + uni(ks[7], (1, 4 * H), H)
    # performance encoder
    p["w_pe1"] = uni(ks[8], (PERF_IN, 32), PERF_IN)
    p["b_pe1"] = uni(ks[9], (1, 32), PERF_IN)
    p["w_pe2"] = uni(ks[10], (32, 16), 32)
    p["b_pe2"] = uni(ks[11], (1, 16), 32)
    # mu head
    p["w_mu"] = uni(ks[12], (H + 16, OUT), H + 16)
    p["b_mu"] = uni(ks[13], (1, OUT), H + 16)
    p["ln_g"] = jnp.ones((1, OUT), jnp.float32)
    p["ln_b"] = jnp.zeros((1, OUT), jnp.float32)
    # sigma head
    p["w_s1"] = uni(ks[14], (H + 16, OUT), H + 16)
    p["b_s1"] = uni(ks[15], (1, OUT), H + 16)
    k2 = jax.random.split(ks[15], 3)
    p["w_s2"] = uni(k2[0], (OUT, OUT), OUT)
    p["b_s2"] = uni(k2[1], (1, OUT), OUT)
    return p


def pack_params(p):
    """One-time host-side packing of ALL weights and biases into a single
    lane-dense [168, 128] f32 slab (call once, OUTSIDE the per-tick hot path)."""
    H = HIDDEN_DIM
    w = jnp.zeros((W_SLAB_ROWS, 128), jnp.float32)
    # stage 0 split-K blocks
    w = w.at[R_WX:R_WX + X_DIM, 0:4 * H].set(p["w_ih0"])
    w = w.at[R_WP:R_WP + PERF_IN, 4 * H:N0].set(p["w_pe1"])
    # stage 1 split-K blocks
    w = w.at[R_WH0:R_WH0 + H, 0:4 * H].set(p["w_ih1"])
    w = w.at[R_WP1:R_WP1 + 32, 4 * H:N1].set(p["w_pe2"])
    # fused (mu | sigma) head first linear
    w = w.at[R_WHEAD:R_WHEAD + 2 * H, 0:OUTPUT_DIM].set(p["w_mu"])
    w = w.at[R_WHEAD:R_WHEAD + 2 * H, OUTPUT_DIM:2 * OUTPUT_DIM].set(p["w_s1"])
    # sigma second linear
    w = w.at[R_WS2:R_WS2 + OUTPUT_DIM, 0:OUTPUT_DIM].set(p["w_s2"])
    # biases folded into one [8,128] tile at the bottom of the slab
    w = w.at[B_BASE + B_ROW_S0, 0:4 * H].set(p["b0"][0])
    w = w.at[B_BASE + B_ROW_S0, 4 * H:N0].set(p["b_pe1"][0])
    w = w.at[B_BASE + B_ROW_S1, 0:4 * H].set(p["b1"][0])
    w = w.at[B_BASE + B_ROW_S1, 4 * H:N1].set(p["b_pe2"][0])
    w = w.at[B_BASE + B_ROW_HEAD, 0:OUTPUT_DIM].set(p["b_mu"][0])
    w = w.at[B_BASE + B_ROW_HEAD, OUTPUT_DIM:2 * OUTPUT_DIM].set(p["b_s1"][0])
    w = w.at[B_BASE + B_ROW_S2, 0:OUTPUT_DIM].set(p["b_s2"][0])
    w = w.at[B_BASE + B_ROW_LNG, 0:OUTPUT_DIM].set(p["ln_g"][0])
    w = w.at[B_BASE + B_ROW_LNB, 0:OUTPUT_DIM].set(p["ln_b"][0])
    return w


def mrms_forward(risk_vector, recent_outcome, perf_memory, w_slab):
    """risk_vector [B,4], recent_outcome [B,3], perf_memory [1,60]
    -> (mu [B,8], sigma [B,8]).

    B requests are batched into the sublane dimension (B=8 fills a vreg); a
    1-D grid over batch tiles keeps the weight slab VMEM-resident via a
    constant index_map and is marked "parallel" for v7x's two TensorCores.

    NOTE: the PyTorch module effectively requires B == 1 (it concatenates a
    [1,16] performance context with the [B,16] LSTM features); for B > 1 the
    perf context is broadcast across the batch, matching the pure-JAX ref."""
    x = jnp.concatenate([risk_vector, recent_outcome], axis=-1).astype(jnp.float32)
    perf = perf_memory.astype(jnp.float32).reshape(1, PERF_IN)
    B = x.shape[0]
    n_tiles = pl.cdiv(B, TILE_B)
    b_pad = n_tiles * TILE_B
    if b_pad != B:
        x = jnp.pad(x, ((0, b_pad - B), (0, 0)))

    flops = 2 * (b_pad * X_DIM * N0 + PERF_IN * N0
                 + b_pad * (HIDDEN_DIM * N1 + 32 * N1
                            + 2 * HIDDEN_DIM * 2 * OUTPUT_DIM
                            + OUTPUT_DIM * OUTPUT_DIM))
    bytes_accessed = 4 * (W_SLAB_ROWS * 128 + PERF_IN
                          + b_pad * (X_DIM + 2 * OUTPUT_DIM))

    out = pl.pallas_call(
        _mrms_kernel,
        out_shape=jax.ShapeDtypeStruct((b_pad, 2 * OUTPUT_DIM), jnp.float32),
        grid_spec=pltpu.PrefetchScalarGridSpec(
            num_scalar_prefetch=0,
            grid=(n_tiles,),
            in_specs=[
                pl.BlockSpec((TILE_B, X_DIM), lambda i: (i, 0)),      # per-tile requests
                pl.BlockSpec((1, PERF_IN), lambda i: (0, 0)),         # resident
                pl.BlockSpec((W_SLAB_ROWS, 128), lambda i: (0, 0)),   # resident weight slab
            ],
            out_specs=pl.BlockSpec((TILE_B, 2 * OUTPUT_DIM), lambda i: (i, 0)),
        ),
        compiler_params=pltpu.CompilerParams(
            dimension_semantics=("parallel",)),
        cost_estimate=pl.CostEstimate(flops=int(flops),
                                      transcendentals=int(256 * b_pad),
                                      bytes_accessed=int(bytes_accessed)),
    )(x, perf, w_slab)
    return out[:B, 0:OUTPUT_DIM], out[:B, OUTPUT_DIM:2 * OUTPUT_DIM]


def mrms_forward_ref(risk_vector, recent_outcome, perf_memory, p):
    """Pure-JAX reference with FULL LSTM math (W_hh, f gate, zero initial state)
    on the unfused params — validates that the kernel's reductions are exact."""
    x = jnp.concatenate([risk_vector, recent_outcome], axis=-1)
    H = HIDDEN_DIM
    B = x.shape[0]

    def cell(inp, w_ih, w_hh, b, h_prev, c_prev):
        g = inp @ w_ih + h_prev @ w_hh + b
        i = jax.nn.sigmoid(g[:, :H]); f = jax.nn.sigmoid(g[:, H:2 * H])
        gg = jnp.tanh(g[:, 2 * H:3 * H]); o = jax.nn.sigmoid(g[:, 3 * H:])
        c = f * c_prev + i * gg
        return o * jnp.tanh(c), c

    z = jnp.zeros((B, H))
    h0, _ = cell(x, p["w_ih0"], p["w_hh0"], p["b0"], z, z)
    h1, _ = cell(h0, p["w_ih1"], p["w_hh1"], p["b1"], z, z)
    p1 = jax.nn.relu(perf_memory @ p["w_pe1"] + p["b_pe1"])
    pc = jax.nn.relu(p1 @ p["w_pe2"] + p["b_pe2"])
    comb = jnp.concatenate([h1, jnp.broadcast_to(pc, (B, 16))], axis=-1)
    mu_lin = comb @ p["w_mu"] + p["b_mu"]
    mean = mu_lin.mean(-1, keepdims=True)
    var = ((mu_lin - mean) ** 2).mean(-1, keepdims=True)
    mu = jnp.tanh((mu_lin - mean) / jnp.sqrt(var + LN_EPS) * p["ln_g"] + p["ln_b"])
    s1 = jax.nn.softplus(comb @ p["w_s1"] + p["b_s1"])
    s2 = jax.nn.softplus(s1 @ p["w_s2"] + p["b_s2"]) + 1e-6
    return mu, s2


if __name__ == "__main__":
    key = jax.random.PRNGKey(0)
    k_param, k_rv, k_ro, k_pm = jax.random.split(key, 4)

    params = init_params(k_param)
    w_slab = pack_params(params)   # one-time packing, off the hot path

    # batch=8 fills one full sublane group (free vs. batch=1); perf context is
    # shared module state and broadcast across the batch, matching the module.
    batch = 8
    risk_vector = jax.random.normal(k_rv, (batch, INPUT_DIM), jnp.float32)
    recent_outcome = jax.random.normal(k_ro, (batch, OUTCOME_DIM), jnp.float32)
    # risk memory buffers start at zeros (_initialize_memory); use a small
    # random fill here to exercise the performance-encoder data path.
    perf_memory = 0.1 * jax.random.normal(k_pm, (1, PERF_IN), jnp.float32)
    # TODO(synk): stateful pieces (self.hidden carry across calls, _update_memory,
    # _adapt_risk_parameters) are host-side Python state and not part of this
    # kernel; the reduced LSTM (no W_hh / f-gate) is exact only while
    # self.hidden is None (the module's initial / reset state).

    mu, sigma = mrms_forward(risk_vector, recent_outcome, perf_memory, w_slab)
    jax.block_until_ready((mu, sigma))

    mu_ref, sigma_ref = mrms_forward_ref(risk_vector, recent_outcome, perf_memory, params)
    np.testing.assert_allclose(np.asarray(mu), np.asarray(mu_ref), rtol=1e-3, atol=1e-4)
    np.testing.assert_allclose(np.asarray(sigma), np.asarray(sigma_ref), rtol=1e-3, atol=1e-4)

    print("KERNEL_OK")
</pallas_src>

<mosaic_0001>
module attributes {stable_mosaic.version = 11 : i64} {
  func.func @_mrms_kernel(%arg0: i32, %arg1: memref<8x7xf32, #tpu.memory_space<vmem>>, %arg2: memref<1x60xf32, #tpu.memory_space<vmem>>, %arg3: memref<168x128xf32, #tpu.memory_space<vmem>>, %arg4: memref<8x16xf32, #tpu.memory_space<vmem>>) attributes {dimension_semantics = [#tpu.dimension_semantics<parallel>], iteration_bounds = array<i64: 1>, scalar_prefetch = 0 : i64, scratch_operands = 0 : i64, tpu.core_type = #tpu.core_type<tc>, window_params = [{transform_indices = @transform_0, window_bounds = array<i64: 8, 7>}, {pipeline_mode = #tpu.pipeline_mode<synchronous>, transform_indices = @transform_1, window_bounds = array<i64: 1, 60>}, {pipeline_mode = #tpu.pipeline_mode<synchronous>, transform_indices = @transform_2, window_bounds = array<i64: 168, 128>}, {transform_indices = @transform_3, window_bounds = array<i64: 8, 16>}]} {
    %c0 = arith.constant 0 : index
    %c0_0 = arith.constant 0 : index
    %0 = vector.load %arg1[%c0, %c0_0] : memref<8x7xf32, #tpu.memory_space<vmem>>, vector<8x7xf32>
    %c0_1 = arith.constant 0 : index
    %c0_2 = arith.constant 0 : index
    %1 = vector.load %arg2[%c0_1, %c0_2] : memref<1x60xf32, #tpu.memory_space<vmem>>, vector<1x60xf32>
    %c160 = arith.constant 160 : index
    %c0_3 = arith.constant 0 : index
    %2 = vector.load %arg3[%c160, %c0_3] : memref<168x128xf32, #tpu.memory_space<vmem>>, vector<8x128xf32>
    %c0_4 = arith.constant 0 : index
    %c0_5 = arith.constant 0 : index
    %3 = vector.load %arg3[%c0_4, %c0_5] : memref<168x128xf32, #tpu.memory_space<vmem>>, vector<7x96xf32>
    %cst = arith.constant dense<0.000000e+00> : vector<8x96xf32>
    %4 = tpu.matmul %0, %3, %cst {dimension_numbers = #tpu.dot_dimension_numbers<[1], [0], [0], [1], [0, 0, 1, 1], [], []>} : vector<8x7xf32>, vector<7x96xf32>, vector<8x96xf32> -> vector<8x96xf32>
    %c8 = arith.constant 8 : index
    %c0_6 = arith.constant 0 : index
    %5 = vector.load %arg3[%c8, %c0_6] : memref<168x128xf32, #tpu.memory_space<vmem>>, vector<60x96xf32>
    %cst_7 = arith.constant dense<0.000000e+00> : vector<1x96xf32>
    %6 = tpu.matmul %1, %5, %cst_7 {dimension_numbers = #tpu.dot_dimension_numbers<[1], [0], [0], [1], [0, 0, 1, 1], [], []>} : vector<1x60xf32>, vector<60x96xf32>, vector<1x96xf32> -> vector<1x96xf32>
    %7 = vector.broadcast %6 : vector<1x96xf32> to vector<8x96xf32>
    %8 = arith.addf %4, %7 : vector<8x96xf32>
    %9 = vector.extract_strided_slice %2 {offsets = [0, 0], sizes = [1, 96], strides = [1, 1]} : vector<8x128xf32> to vector<1x96xf32>
    %10 = vector.broadcast %9 : vector<1x96xf32> to vector<8x96xf32>
    %11 = arith.addf %8, %10 : vector<8x96xf32>
    %12 = vector.extract_strided_slice %11 {offsets = [0, 0], sizes = [8, 64], strides = [1, 1]} : vector<8x96xf32> to vector<8x64xf32>
    %13 = arith.negf %12 : vector<8x64xf32>
    %14 = math.exp %13 : vector<8x64xf32>
    %cst_8 = arith.constant 1.000000e+00 : f32
    %15 = vector.broadcast %cst_8 : f32 to vector<8x64xf32>
    %16 = arith.addf %15, %14 : vector<8x64xf32>
    %17 = arith.divf %15, %16 : vector<8x64xf32>
    %18 = vector.extract_strided_slice %12 {offsets = [0, 32], sizes = [8, 16], strides = [1, 1]} : vector<8x64xf32> to vector<8x16xf32>
    %19 = math.tanh %18 : vector<8x16xf32>
    %20 = vector.extract_strided_slice %17 {offsets = [0, 0], sizes = [8, 16], strides = [1, 1]} : vector<8x64xf32> to vector<8x16xf32>
    %21 = arith.mulf %20, %19 : vector<8x16xf32>
    %22 = vector.extract_strided_slice %17 {offsets = [0, 48], sizes = [8, 16], strides = [1, 1]} : vector<8x64xf32> to vector<8x16xf32>
    %23 = math.tanh %21 : vector<8x16xf32>
    %24 = arith.mulf %22, %23 : vector<8x16xf32>
    %25 = vector.extract_strided_slice %11 {offsets = [0, 64], sizes = [8, 32], strides = [1, 1]} : vector<8x96xf32> to vector<8x32xf32>
    %cst_9 = arith.constant 0.000000e+00 : f32
    %26 = vector.broadcast %cst_9 : f32 to vector<8x32xf32>
    %27 = arith.maximumf %25, %26 : vector<8x32xf32>
    %c72 = arith.constant 72 : index
    %c0_10 = arith.constant 0 : index
    %28 = vector.load %arg3[%c72, %c0_10] : memref<168x128xf32, #tpu.memory_space<vmem>>, vector<16x80xf32>
    %cst_11 = arith.constant dense<0.000000e+00> : vector<8x80xf32>
    %29 = tpu.matmul %24, %28, %cst_11 {dimension_numbers = #tpu.dot_dimension_numbers<[1], [0], [0], [1], [0, 0, 1, 1], [], []>} : vector<8x16xf32>, vector<16x80xf32>, vector<8x80xf32> -> vector<8x80xf32>
    %c88 = arith.constant 88 : index
    %c0_12 = arith.constant 0 : index
    %30 = vector.load %arg3[%c88, %c0_12] : memref<168x128xf32, #tpu.memory_space<vmem>>, vector<32x80xf32>
    %cst_13 = arith.constant dense<0.000000e+00> : vector<8x80xf32>
    %31 = tpu.matmul %27, %30, %cst_13 {dimension_numbers = #tpu.dot_dimension_numbers<[1], [0], [0], [1], [0, 0, 1, 1], [], []>} : vector<8x32xf32>, vector<32x80xf32>, vector<8x80xf32> -> vector<8x80xf32>
    %32 = arith.addf %29, %31 : vector<8x80xf32>
    %33 = vector.extract_strided_slice %2 {offsets = [1, 0], sizes = [1, 80], strides = [1, 1]} : vector<8x128xf32> to vector<1x80xf32>
    %34 = vector.broadcast %33 : vector<1x80xf32> to vector<8x80xf32>
    %35 = arith.addf %32, %34 : vector<8x80xf32>
    %36 = vector.extract_strided_slice %35 {offsets = [0, 0], sizes = [8, 64], strides = [1, 1]} : vector<8x80xf32> to vector<8x64xf32>
    %37 = arith.negf %36 : vector<8x64xf32>
    %38 = math.exp %37 : vector<8x64xf32>
    %cst_14 = arith.constant 1.000000e+00 : f32
    %39 = vector.broadcast %cst_14 : f32 to vector<8x64xf32>
    %40 = arith.addf %39, %38 : vector<8x64xf32>
    %41 = arith.divf %39, %40 : vector<8x64xf32>
    %42 = vector.extract_strided_slice %36 {offsets = [0, 32], sizes = [8, 16], strides = [1, 1]} : vector<8x64xf32> to vector<8x16xf32>
    %43 = math.tanh %42 : vector<8x16xf32>
    %44 = vector.extract_strided_slice %41 {offsets = [0, 0], sizes = [8, 16], strides = [1, 1]} : vector<8x64xf32> to vector<8x16xf32>
    %45 = arith.mulf %44, %43 : vector<8x16xf32>
    %46 = vector.extract_strided_slice %41 {offsets = [0, 48], sizes = [8, 16], strides = [1, 1]} : vector<8x64xf32> to vector<8x16xf32>
    %47 = math.tanh %45 : vector<8x16xf32>
    %48 = arith.mulf %46, %47 : vector<8x16xf32>
    %49 = vector.extract_strided_slice %35 {offsets = [0, 64], sizes = [8, 16], strides = [1, 1]} : vector<8x80xf32> to vector<8x16xf32>
    %cst_15 = arith.constant 0.000000e+00 : f32
    %50 = vector.broadcast %cst_15 : f32 to vector<8x16xf32>
    %51 = arith.maximumf %49, %50 : vector<8x16xf32>
    %c120 = arith.constant 120 : index
    %c0_16 = arith.constant 0 : index
    %52 = vector.load %arg3[%c120, %c0_16] : memref<168x128xf32, #tpu.memory_space<vmem>>, vector<16x16xf32>
    %cst_17 = arith.constant dense<0.000000e+00> : vector<8x16xf32>
    %53 = tpu.matmul %48, %52, %cst_17 {dimension_numbers = #tpu.dot_dimension_numbers<[1], [0], [0], [1], [0, 0, 1, 1], [], []>} : vector<8x16xf32>, vector<16x16xf32>, vector<8x16xf32> -> vector<8x16xf32>
    %c136 = arith.constant 136 : index
    %c0_18 = arith.constant 0 : index
    %54 = vector.load %arg3[%c136, %c0_18] : memref<168x128xf32, #tpu.memory_space<vmem>>, vector<16x16xf32>
    %cst_19 = arith.constant dense<0.000000e+00> : vector<8x16xf32>
    %55 = tpu.matmul %51, %54, %cst_19 {dimension_numbers = #tpu.dot_dimension_numbers<[1], [0], [0], [1], [0, 0, 1, 1], [], []>} : vector<8x16xf32>, vector<16x16xf32>, vector<8x16xf32> -> vector<8x16xf32>
    %56 = arith.addf %53, %55 : vector<8x16xf32>
    %57 = vector.extract_strided_slice %2 {offsets = [2, 0], sizes = [1, 16], strides = [1, 1]} : vector<8x128xf32> to vector<1x16xf32>
    %58 = vector.broadcast %57 : vector<1x16xf32> to vector<8x16xf32>
    %59 = arith.addf %56, %58 : vector<8x16xf32>
    %60 = vector.extract_strided_slice %59 {offsets = [0, 0], sizes = [8, 8], strides = [1, 1]} : vector<8x16xf32> to vector<8x8xf32>
    %61 = vector.extract_strided_slice %59 {offsets = [0, 8], sizes = [8, 8], strides = [1, 1]} : vector<8x16xf32> to vector<8x8xf32>
    %cst_20 = arith.constant dense<0.000000e+00> : vector<8xf32>
    %62 = vector.multi_reduction <add>, %60, %cst_20 [1] : vector<8x8xf32> to vector<8xf32>
    %63 = vector.shape_cast %62 : vector<8xf32> to vector<8x1xf32>
    %cst_21 = arith.constant 8.000000e+00 : f32
    %64 = vector.broadcast %cst_21 : f32 to vector<8x1xf32>
    %65 = arith.divf %63, %64 : vector<8x1xf32>
    %66 = vector.broadcast %65 : vector<8x1xf32> to vector<8x8xf32>
    %67 = arith.subf %60, %66 : vector<8x8xf32>
    %68 = arith.mulf %67, %67 : vector<8x8xf32>
    %cst_22 = arith.constant dense<0.000000e+00> : vector<8xf32>
    %69 = vector.multi_reduction <add>, %68, %cst_22 [1] : vector<8x8xf32> to vector<8xf32>
    %70 = vector.shape_cast %69 : vector<8xf32> to vector<8x1xf32>
    %cst_23 = arith.constant 8.000000e+00 : f32
    %71 = vector.broadcast %cst_23 : f32 to vector<8x1xf32>
    %72 = arith.divf %70, %71 : vector<8x1xf32>
    %73 = vector.broadcast %65 : vector<8x1xf32> to vector<8x8xf32>
    %74 = arith.subf %60, %73 : vector<8x8xf32>
    %cst_24 = arith.constant 9.99999974E-6 : f32
    %75 = vector.broadcast %cst_24 : f32 to vector<8x1xf32>
    %76 = arith.addf %72, %75 : vector<8x1xf32>
    %77 = math.rsqrt %76 : vector<8x1xf32>
    %78 = vector.broadcast %77 : vector<8x1xf32> to vector<8x8xf32>
    %79 = arith.mulf %74, %78 : vector<8x8xf32>
    %80 = vector.extract_strided_slice %2 {offsets = [4, 0], sizes = [1, 8], strides = [1, 1]} : vector<8x128xf32> to vector<1x8xf32>
    %81 = vector.broadcast %80 : vector<1x8xf32> to vector<8x8xf32>
    %82 = arith.mulf %79, %81 : vector<8x8xf32>
    %83 = vector.extract_strided_slice %2 {offsets = [5, 0], sizes = [1, 8], strides = [1, 1]} : vector<8x128xf32> to vector<1x8xf32>
    %84 = vector.broadcast %83 : vector<1x8xf32> to vector<8x8xf32>
    %85 = arith.addf %82, %84 : vector<8x8xf32>
    %86 = math.tanh %85 : vector<8x8xf32>
    %cst_25 = arith.constant 2.000000e+01 : f32
    %87 = vector.broadcast %cst_25 : f32 to vector<8x8xf32>
    %88 = arith.cmpf ogt, %61, %87 : vector<8x8xf32>
    %cst_26 = arith.constant 2.000000e+01 : f32
    %89 = vector.broadcast %cst_26 : f32 to vector<8x8xf32>
    %90 = arith.minimumf %61, %89 : vector<8x8xf32>
    %91 = math.exp %90 : vector<8x8xf32>
    %92 = math.log1p %91 : vector<8x8xf32>
    %93 = arith.select %88, %61, %92 : vector<8x8xi1>, vector<8x8xf32>
    %c152 = arith.constant 152 : index
    %c0_27 = arith.constant 0 : index
    %94 = vector.load %arg3[%c152, %c0_27] : memref<168x128xf32, #tpu.memory_space<vmem>>, vector<8x8xf32>
    %cst_28 = arith.constant dense<0.000000e+00> : vector<8x8xf32>
    %95 = tpu.matmul %93, %94, %cst_28 {dimension_numbers = #tpu.dot_dimension_numbers<[1], [0], [0], [1], [0, 0, 1, 1], [], []>} : vector<8x8xf32>, vector<8x8xf32>, vector<8x8xf32> -> vector<8x8xf32>
    %96 = vector.extract_strided_slice %2 {offsets = [3, 0], sizes = [1, 8], strides = [1, 1]} : vector<8x128xf32> to vector<1x8xf32>
    %97 = vector.broadcast %96 : vector<1x8xf32> to vector<8x8xf32>
    %98 = arith.addf %95, %97 : vector<8x8xf32>
    %cst_29 = arith.constant 2.000000e+01 : f32
    %99 = vector.broadcast %cst_29 : f32 to vector<8x8xf32>
    %100 = arith.cmpf ogt, %98, %99 : vector<8x8xf32>
    %cst_30 = arith.constant 2.000000e+01 : f32
    %101 = vector.broadcast %cst_30 : f32 to vector<8x8xf32>
    %102 = arith.minimumf %98, %101 : vector<8x8xf32>
    %103 = math.exp %102 : vector<8x8xf32>
    %104 = math.log1p %103 : vector<8x8xf32>
    %105 = arith.select %100, %98, %104 : vector<8x8xi1>, vector<8x8xf32>
    %cst_31 = arith.constant 9.99999997E-7 : f32
    %106 = vector.broadcast %cst_31 : f32 to vector<8x8xf32>
    %107 = arith.addf %105, %106 : vector<8x8xf32>
    %108 = tpu.concatenate %86, %107 in 1 : vector<8x8xf32>, vector<8x8xf32> -> vector<8x16xf32>
    %c0_32 = arith.constant 0 : index
    %c0_33 = arith.constant 0 : index
    %109 = vector.load %arg4[%c0_32, %c0_33] : memref<8x16xf32, #tpu.memory_space<vmem>>, vector<8x16xf32>
    tpu.vector_store %arg4[%c0_32, %c0_33], %108 {strides = array<i32>} : memref<8x16xf32, #tpu.memory_space<vmem>>, vector<8x16xf32>,
    return
  }
  func.func @transform_0(%arg0: i32) -> (i32, i32) {
    %c0_i32 = arith.constant 0 : i32
    %c0_i32_0 = arith.constant 0 : i32
    return %arg0, %c0_i32 : i32, i32
  }
  func.func @transform_1(%arg0: i32) -> (i32, i32) {
    %c0_i32 = arith.constant 0 : i32
    %c0_i32_0 = arith.constant 0 : i32
    %c0_i32_1 = arith.constant 0 : i32
    return %c0_i32, %c0_i32_0 : i32, i32
  }
  func.func @transform_2(%arg0: i32) -> (i32, i32) {
    %c0_i32 = arith.constant 0 : i32
    %c0_i32_0 = arith.constant 0 : i32
    %c0_i32_1 = arith.constant 0 : i32
    return %c0_i32, %c0_i32_0 : i32, i32
  }
  func.func @transform_3(%arg0: i32) -> (i32, i32) {
    %c0_i32 = arith.constant 0 : i32
    %c0_i32_0 = arith.constant 0 : i32
    return %arg0, %c0_i32 : i32, i32
  }
}

</mosaic_0001>

<llo_original>
// kernel: tpu_custom_call.1
$region0: #{tpu_custom_call.1}
  #allocation0 [shape = 'u32[]', space=smem, size = 0x4, offset = 0x4, fixed_abs, tag = 'smem constant byte address 0x4 - core index']
  #allocation1 [shape = 'u32[144,128]{1,0:T(1,128)}', space=vmem, size = 0x12000, scoped, tag = 'internal scratch']
  %s0 = inlined_call_operand.hbm [shape: f32[8,7], index: 0, kind: input, shape index: {}]
  %s1 = inlined_call_operand.vmem [shape: f32[1,60], index: 1, kind: input, shape index: {}]
  %s2 = inlined_call_operand.hbm [shape: f32[168,128], index: 2, kind: input, shape index: {}]
  %s3 = inlined_call_operand.hbm [shape: f32[8,16], index: 3, kind: output, shape index: {}]
  %s4 = sld [smem:[#allocation0]]
  $region30: #{tpu_custom_call.1} parent=0
    _
  %s6 = ssub.s32 1, %s4
  %s7 = scalar_select 0, %s6, %s4
  $region1: #{tpu_custom_call.1} parent=0
    #allocation2 [shape = 'u8[4096]{0}', space=vmem, size = 0x1000, scoped, tag = 'input window, operand 0, single buffered']
    #allocation3 [shape = 's32[1]{0}', space=sflag, size = 0x4, scoped, tag = 'scoped memory for tpu_custom_call.1']
    #allocation4 [shape = 's32[1]{0}', space=sflag, size = 0x4, scoped, tag = 'scoped memory for tpu_custom_call.1']
    #allocation5 [shape = 'u8[86016]{0}', space=vmem, size = 0x15000, scoped, tag = 'input window, operand 2, single buffered']
    #allocation6 [shape = 's32[1]{0}', space=sflag, size = 0x4, scoped, tag = 'scoped memory for tpu_custom_call.1']
    #allocation7 [shape = 'u8[4096]{0}', space=vmem, size = 0x1000, scoped, tag = 'output window, operand 0, single buffered']
    %8 = vsyncpa [#allocation3], 0
    %9 = vsyncpa [#allocation6], 0
    %10 = vsyncpa [#allocation4], 0
    // Predicated region
    $region2: #{tpu_custom_call.1} parent=1 // pred_check
      _
    $region3: #{tpu_custom_call.1} parent=1 // pred_check_branch
      %12 = sbr.rel (0) target = $region5
    $region4: #{tpu_custom_call.1} parent=1 // pred_region
      %s14 = ssub.s32 128, 128
      %15 = vsyncadd [#allocation3], %s14
      %s17 = sshll.u32 [#allocation2], 4
      %s18 = int_to_ptr.vmem [resolvable:$true] %s17
      %20 = dma.hbm_to_vmem [thread:$0]  %s0, 128, %s18, [#allocation3]
    $region5: #{tpu_custom_call.1} parent=1 // pred_fallthru
      _
    // Predicated region
    $region6: #{tpu_custom_call.1} parent=1 // pred_check
      _
    $region7: #{tpu_custom_call.1} parent=1 // pred_check_branch
      %22 = sbr.rel (0) target = $region9
    $region8: #{tpu_custom_call.1} parent=1 // pred_region
      _
    $region9: #{tpu_custom_call.1} parent=1 // pred_fallthru
      _
    // Predicated region
    $region10: #{tpu_custom_call.1} parent=1 // pred_check
      _
    $region11: #{tpu_custom_call.1} parent=1 // pred_check_branch
      %24 = sbr.rel (0) target = $region13
    $region12: #{tpu_custom_call.1} parent=1 // pred_region
      %s26 = ssub.s32 2688, 2688
      %27 = vsyncadd [#allocation6], %s26
      %s28 = sshll.u32 [#allocation5], 4
      %s29 = int_to_ptr.vmem [resolvable:$true] %s28
      %34 = dma.hbm_to_vmem [thread:$0]  %s2, 2688, %s29, [#allocation6], 128, 128, 8
    $region13: #{tpu_custom_call.1} parent=1 // pred_fallthru
      _
    // Predicated region
    $region14: #{tpu_custom_call.1} parent=1 // pred_check
      _
    $region15: #{tpu_custom_call.1} parent=1 // pred_check_branch
      %36 = sbr.rel (0) target = $region17
    $region16: #{tpu_custom_call.1} parent=1 // pred_region
      %37 = dma.done [#allocation3], 128
    $region17: #{tpu_custom_call.1} parent=1 // pred_fallthru
      _
    // Predicated region
    $region18: #{tpu_custom_call.1} parent=1 // pred_check
      _
    $region19: #{tpu_custom_call.1} parent=1 // pred_check_branch
      %39 = sbr.rel (0) target = $region21
    $region20: #{tpu_custom_call.1} parent=1 // pred_region
      %40 = dma.done [#allocation6], 2688
    $region21: #{tpu_custom_call.1} parent=1 // pred_fallthru
      _
    %v41 = vld [vmem:[#allocation2] sm:$0xff]
    %v42 = vld [vmem:[%s1] sm:$0x1]
    %v43 = vld [vmem:[#allocation5 + $0xa0] sm:$0xff]
    %v44 = vld [vmem:[#allocation5] sm:$0x7f]
    %v45 = vld [vmem:[#allocation5 + $0x8] sm:$0xff]
    %v46 = vld [vmem:[#allocation5 + $0x10] sm:$0xff]
    %v47 = vld [vmem:[#allocation5 + $0x18] sm:$0xff]
    %v48 = vld [vmem:[#allocation5 + $0x20] sm:$0xff]
    %v49 = vld [vmem:[#allocation5 + $0x28] sm:$0xff]
    %v50 = vld [vmem:[#allocation5 + $0x30] sm:$0xff]
    %v51 = vld [vmem:[#allocation5 + $0x38] sm:$0xff]
    %v52 = vld [vmem:[#allocation5 + $0x40] sm:$0xf]
    %vm53 = vcmask 490496
    %v55 = vsel %vm53, %v42, 0
    %vm57 = vcmask 1043456
    %v59 = vsel %vm57, %v52, 0
    %61 = vmatprep.subr.mxu0 0.0
    %62 = vmatpush1.msra.mxu0 %v45
    %63 = vmatprep.subr.mxu0 0.0
    %64 = vmatpush1.msra.mxu0 %v46
    %65 = vmatprep.subr.mxu0 0.0
    %66 = vmatpush1.msra.mxu0 %v47
    %67 = vmatprep.subr.mxu0 0.0
    %68 = vmatpush1.msra.mxu0 %v48
    %69 = vmatprep.subr.mxu0 0.0
    %70 = vmatpush1.msra.mxu0 %v49
    %71 = vmatprep.subr.mxu0 0.0
    %72 = vmatpush1.msra.mxu0 %v50
    %73 = vmatprep.subr.mxu0 0.0
    %74 = vmatpush1.msra.mxu0 %v51
    %75 = vmatprep.subr.mxu0 0.0
    %76 = vmatpush1.msra.mxu0 %v59
    %77 = vmatprep.subr.mxu0 0.0
    %78 = vmatpush1.msra.mxu0 0.0
    %79 = vmatprep.subr.mxu0 0.0
    %80 = vmatpush1.msra.mxu0 0.0
    %81 = vmatprep.subr.mxu0 0.0
    %82 = vmatpush1.msra.mxu0 0.0
    %83 = vmatprep.subr.mxu0 0.0
    %84 = vmatpush1.msra.mxu0 0.0
    %85 = vmatprep.subr.mxu0 0.0
    %86 = vmatpush1.msra.mxu0 0.0
    %87 = vmatprep.subr.mxu0 0.0
    %88 = vmatpush1.msra.mxu0 0.0
    %89 = vmatprep.subr.mxu0 0.0
    %90 = vmatpush1.msra.mxu0 0.0
    %91 = vmatprep.subr.mxu0 0.0
    %92 = vmatpush1.msra.mxu0 0.0
    %93 = vmatprep.subr.mxu0 0.0
    %94 = vmatpush1.msra.mxu0 0.0
    %95 = vmatprep.subr.mxu0 0.0
    %96 = vmatpush1.msra.mxu0 0.0
    %97 = vmatprep.subr.mxu0 0.0
    %98 = vmatpush1.msra.mxu0 0.0
    %99 = vmatprep.subr.mxu0 0.0
    %100 = vmatpush1.msra.mxu0 0.0
    %101 = vmatprep.subr.mxu0 0.0
    %102 = vmatpush1.msra.mxu0 0.0
    %103 = vmatprep.subr.mxu0 0.0
    %104 = vmatpush1.msra.mxu0 0.0
    %105 = vmatprep.subr.mxu0 0.0
    %106 = vmatpush1.msra.mxu0 0.0
    %107 = vmatprep.subr.mxu0 0.0
    %108 = vmatpush1.msra.mxu0 0.0
    %109 = vmatprep.subr.mxu0 0.0
    %110 = vmatpush1.msra.mxu0 0.0
    %111 = vmatprep.subr.mxu0 0.0
    %112 = vmatpush1.msra.mxu0 0.0
    %113 = vmatprep.subr.mxu0 0.0
    %114 = vmatpush1.msra.mxu0 0.0
    %115 = vmatprep.subr.mxu0 0.0
    %116 = vmatpush1.msra.mxu0 0.0
    %117 = vmatprep.subr.mxu0 0.0
    %118 = vmatpush1.msra.mxu0 0.0
    %119 = vmatprep.subr.mxu0 0.0
    %120 = vmatpush1.msra.mxu0 0.0
    %121 = vmatprep.subr.mxu0 0.0
    %122 = vmatpush1.msra.mxu0 0.0
    %123 = vmatprep.subr.mxu0 0.0
    %124 = vmatpush1.msra.mxu0 0.0
    %125 = vmatprep.mubr.f32.mxu0 0.0
    %126 = vmatmul.mubr.f32.gmra.mrb[0].mxu0 %v55
    %v127 = vpop.f32.mrb[0].mxu0
    %v128 = vadd.f32 0.0, %v127
    %v129 = vpop.f32.mrb[0].mxu0
    %130 = vdwg.mxu0
    %v131 = vlaneseq
    %v132 = vshrl.u32 %v131, 7
    %v133 = vsub.s32 0, %v132
    %v134 = vrot.slane %v128, %v133
    %vm135 = vcmask 56320
    %v137 = vsel %vm135, %v41, 0
    %vm139 = vcmask 1046528
    %v141 = vsel %vm139, %v44, 0
    %143 = vmatprep.subr.mxu0 0.0
    %144 = vmatpush1.msra.mxu0 %v141
    %145 = vmatprep.subr.mxu0 0.0
    %146 = vmatpush1.msra.mxu0 0.0
    %147 = vmatprep.subr.mxu0 0.0
    %148 = vmatpush1.msra.mxu0 0.0
    %149 = vmatprep.subr.mxu0 0.0
    %150 = vmatpush1.msra.mxu0 0.0
    %151 = vmatprep.subr.mxu0 0.0
    %152 = vmatpush1.msra.mxu0 0.0
    %153 = vmatprep.subr.mxu0 0.0
    %154 = vmatpush1.msra.mxu0 0.0
    %155 = vmatprep.subr.mxu0 0.0
    %156 = vmatpush1.msra.mxu0 0.0
    %157 = vmatprep.subr.mxu0 0.0
    %158 = vmatpush1.msra.mxu0 0.0
    %159 = vmatprep.subr.mxu0 0.0
    %160 = vmatpush1.msra.mxu0 0.0
    %161 = vmatprep.subr.mxu0 0.0
    %162 = vmatpush1.msra.mxu0 0.0
    %163 = vmatprep.subr.mxu0 0.0
    %164 = vmatpush1.msra.mxu0 0.0
    %165 = vmatprep.subr.mxu0 0.0
    %166 = vmatpush1.msra.mxu0 0.0
    %167 = vmatprep.subr.mxu0 0.0
    %168 = vmatpush1.msra.mxu0 0.0
    %169 = vmatprep.subr.mxu0 0.0
    %170 = vmatpush1.msra.mxu0 0.0
    %171 = vmatprep.subr.mxu0 0.0
    %172 = vmatpush1.msra.mxu0 0.0
    %173 = vmatprep.subr.mxu0 0.0
    %174 = vmatpush1.msra.mxu0 0.0
    %175 = vmatprep.subr.mxu0 0.0
    %176 = vmatpush1.msra.mxu0 0.0
    %177 = vmatprep.subr.mxu0 0.0
    %178 = vmatpush1.msra.mxu0 0.0
    %179 = vmatprep.subr.mxu0 0.0
    %180 = vmatpush1.msra.mxu0 0.0
    %181 = vmatprep.subr.mxu0 0.0
    %182 = vmatpush1.msra.mxu0 0.0
    %183 = vmatprep.subr.mxu0 0.0
    %184 = vmatpush1.msra.mxu0 0.0
    %185 = vmatprep.subr.mxu0 0.0
    %186 = vmatpush1.msra.mxu0 0.0
    %187 = vmatprep.subr.mxu0 0.0
    %188 = vmatpush1.msra.mxu0 0.0
    %189 = vmatprep.subr.mxu0 0.0
    %190 = vmatpush1.msra.mxu0 0.0
    %191 = vmatprep.subr.mxu0 0.0
    %192 = vmatpush1.msra.mxu0 0.0
    %193 = vmatprep.subr.mxu0 0.0
    %194 = vmatpush1.msra.mxu0 0.0
    %195 = vmatprep.subr.mxu0 0.0
    %196 = vmatpush1.msra.mxu0 0.0
    %197 = vmatprep.subr.mxu0 0.0
    %198 = vmatpush1.msra.mxu0 0.0
    %199 = vmatprep.subr.mxu0 0.0
    %200 = vmatpush1.msra.mxu0 0.0
    %201 = vmatprep.subr.mxu0 0.0
    %202 = vmatpush1.msra.mxu0 0.0
    %203 = vmatprep.subr.mxu0 0.0
    %204 = vmatpush1.msra.mxu0 0.0
    %205 = vmatprep.subr.mxu0 0.0
    %206 = vmatpush1.msra.mxu0 0.0
    %207 = vmatprep.mubr.f32.mxu0 0.0
    %208 = vmatmul.mubr.f32.gmra.mrb[0].mxu0 %v137
    %v209 = vpop.f32.mrb[0].mxu0
    %v210 = vadd.f32 %v134, %v209
    %v211 = vpop.f32.mrb[0].mxu0
    %212 = vdwg.mxu0
    %v213 = vlaneseq
    %v214 = vshrl.u32 %v213, 7
    %v215 = vsub.s32 0, %v214
    %v216 = vrot.slane %v43, %v215
    %v217 = vadd.f32 %v210, %v216
    %v218 = vxor.u32 %v217, 2147483648
    %v219 = vmul.f32 %v218, 1.442695
    %v220 = vpow.pop %v219
    %v221 = vadd.f32 %v220, 1.0
    %v222 = vrcp.pop %v221
    %v223 = vmul.f32 1.0, %v222
    %v224 = vtanh.pop %v217
    %226 = vrot.lane.b32.xlu0 %v224, 96
    %v227 = vpop.permute.xlu0 %226
    %v229 = vmul.f32 %v223, %v227
    %v230 = vtanh.pop %v229
    %232 = vrot.lane.b32.xlu0 %v230, 48
    %v233 = vpop.permute.xlu0 %232
    %v235 = vmul.f32 %v223, %v233
    %v236 = vmax.f32 %v217, 0.0
    %v237 = vld [vmem:[#allocation5 + $0x48] sm:$0xff]
    %v238 = vld [vmem:[#allocation5 + $0x50] sm:$0xff]
    %v239 = vld [vmem:[#allocation5 + $0x58] sm:$0xff]
    %v240 = vld [vmem:[#allocation5 + $0x60] sm:$0xff]
    %v241 = vld [vmem:[#allocation5 + $0x68] sm:$0xff]
    %v242 = vld [vmem:[#allocation5 + $0x70] sm:$0xff]
    %244 = vrot.lane.b32.xlu0 %v236, 64
    %v245 = vpop.permute.xlu0 %244
    %vm246 = vcmask 261120
    %v247 = vsel %vm246, %v245, 0
    %249 = vmatprep.subr.mxu0 0.0
    %250 = vmatpush1.msra.mxu0 %v239
    %251 = vmatprep.subr.mxu0 0.0
    %252 = vmatpush1.msra.mxu0 %v240
    %253 = vmatprep.subr.mxu0 0.0
    %254 = vmatpush1.msra.mxu0 %v241
    %255 = vmatprep.subr.mxu0 0.0
    %256 = vmatpush1.msra.mxu0 %v242
    %257 = vmatprep.subr.mxu0 0.0
    %258 = vmatpush1.msra.mxu0 0.0
    %259 = vmatprep.subr.mxu0 0.0
    %260 = vmatpush1.msra.mxu0 0.0
    %261 = vmatprep.subr.mxu0 0.0
    %262 = vmatpush1.msra.mxu0 0.0
    %263 = vmatprep.subr.mxu0 0.0
    %264 = vmatpush1.msra.mxu0 0.0
    %265 = vmatprep.subr.mxu0 0.0
    %266 = vmatpush1.msra.mxu0 0.0
    %267 = vmatprep.subr.mxu0 0.0
    %268 = vmatpush1.msra.mxu0 0.0
    %269 = vmatprep.subr.mxu0 0.0
    %270 = vmatpush1.msra.mxu0 0.0
    %271 = vmatprep.subr.mxu0 0.0
    %272 = vmatpush1.msra.mxu0 0.0
    %273 = vmatprep.subr.mxu0 0.0
    %274 = vmatpush1.msra.mxu0 0.0
    %275 = vmatprep.subr.mxu0 0.0
    %276 = vmatpush1.msra.mxu0 0.0
    %277 = vmatprep.subr.mxu0 0.0
    %278 = vmatpush1.msra.mxu0 0.0
    %279 = vmatprep.subr.mxu0 0.0
    %280 = vmatpush1.msra.mxu0 0.0
    %281 = vmatprep.subr.mxu0 0.0
    %282 = vmatpush1.msra.mxu0 0.0
    %283 = vmatprep.subr.mxu0 0.0
    %284 = vmatpush1.msra.mxu0 0.0
    %285 = vmatprep.subr.mxu0 0.0
    %286 = vmatpush1.msra.mxu0 0.0
    %287 = vmatprep.subr.mxu0 0.0
    %288 = vmatpush1.msra.mxu0 0.0
    %289 = vmatprep.subr.mxu0 0.0
    %290 = vmatpush1.msra.mxu0 0.0
    %291 = vmatprep.subr.mxu0 0.0
    %292 = vmatpush1.msra.mxu0 0.0
    %293 = vmatprep.subr.mxu0 0.0
    %294 = vmatpush1.msra.mxu0 0.0
    %295 = vmatprep.subr.mxu0 0.0
    %296 = vmatpush1.msra.mxu0 0.0
    %297 = vmatprep.subr.mxu0 0.0
    %298 = vmatpush1.msra.mxu0 0.0
    %299 = vmatprep.subr.mxu0 0.0
    %300 = vmatpush1.msra.mxu0 0.0
    %301 = vmatprep.subr.mxu0 0.0
    %302 = vmatpush1.msra.mxu0 0.0
    %303 = vmatprep.subr.mxu0 0.0
    %304 = vmatpush1.msra.mxu0 0.0
    %305 = vmatprep.subr.mxu0 0.0
    %306 = vmatpush1.msra.mxu0 0.0
    %307 = vmatprep.subr.mxu0 0.0
    %308 = vmatpush1.msra.mxu0 0.0
    %309 = vmatprep.subr.mxu0 0.0
    %310 = vmatpush1.msra.mxu0 0.0
    %311 = vmatprep.subr.mxu0 0.0
    %312 = vmatpush1.msra.mxu0 0.0
    %313 = vmatprep.mubr.f32.mxu0 0.0
    %314 = vmatmul.mubr.f32.gmra.mrb[0].mxu0 %v247
    %v315 = vpop.f32.mrb[0].mxu0
    %v316 = vadd.f32 0.0, %v315
    %v317 = vpop.f32.mrb[0].mxu0
    %318 = vdwg.mxu0
    %320 = vrot.lane.b32.xlu0 %v235, 80
    %v321 = vpop.permute.xlu0 %320
    %vm322 = vcmask 130048
    %v323 = vsel %vm322, %v321, 0
    %325 = vmatprep.subr.mxu0 0.0
    %326 = vmatpush1.msra.mxu0 %v237
    %327 = vmatprep.subr.mxu0 0.0
    %328 = vmatpush1.msra.mxu0 %v238
    %329 = vmatprep.subr.mxu0 0.0
    %330 = vmatpush1.msra.mxu0 0.0
    %331 = vmatprep.subr.mxu0 0.0
    %332 = vmatpush1.msra.mxu0 0.0
    %333 = vmatprep.subr.mxu0 0.0
    %334 = vmatpush1.msra.mxu0 0.0
    %335 = vmatprep.subr.mxu0 0.0
    %336 = vmatpush1.msra.mxu0 0.0
    %337 = vmatprep.subr.mxu0 0.0
    %338 = vmatpush1.msra.mxu0 0.0
    %339 = vmatprep.subr.mxu0 0.0
    %340 = vmatpush1.msra.mxu0 0.0
    %341 = vmatprep.subr.mxu0 0.0
    %342 = vmatpush1.msra.mxu0 0.0
    %343 = vmatprep.subr.mxu0 0.0
    %344 = vmatpush1.msra.mxu0 0.0
    %345 = vmatprep.subr.mxu0 0.0
    %346 = vmatpush1.msra.mxu0 0.0
    %347 = vmatprep.subr.mxu0 0.0
    %348 = vmatpush1.msra.mxu0 0.0
    %349 = vmatprep.subr.mxu0 0.0
    %350 = vmatpush1.msra.mxu0 0.0
    %351 = vmatprep.subr.mxu0 0.0
    %352 = vmatpush1.msra.mxu0 0.0
    %353 = vmatprep.subr.mxu0 0.0
    %354 = vmatpush1.msra.mxu0 0.0
    %355 = vmatprep.subr.mxu0 0.0
    %356 = vmatpush1.msra.mxu0 0.0
    %357 = vmatprep.subr.mxu0 0.0
    %358 = vmatpush1.msra.mxu0 0.0
    %359 = vmatprep.subr.mxu0 0.0
    %360 = vmatpush1.msra.mxu0 0.0
    %361 = vmatprep.subr.mxu0 0.0
    %362 = vmatpush1.msra.mxu0 0.0
    %363 = vmatprep.subr.mxu0 0.0
    %364 = vmatpush1.msra.mxu0 0.0
    %365 = vmatprep.subr.mxu0 0.0
    %366 = vmatpush1.msra.mxu0 0.0
    %367 = vmatprep.subr.mxu0 0.0
    %368 = vmatpush1.msra.mxu0 0.0
    %369 = vmatprep.subr.mxu0 0.0
    %370 = vmatpush1.msra.mxu0 0.0
    %371 = vmatprep.subr.mxu0 0.0
    %372 = vmatpush1.msra.mxu0 0.0
    %373 = vmatprep.subr.mxu0 0.0
    %374 = vmatpush1.msra.mxu0 0.0
    %375 = vmatprep.subr.mxu0 0.0
    %376 = vmatpush1.msra.mxu0 0.0
    %377 = vmatprep.subr.mxu0 0.0
    %378 = vmatpush1.msra.mxu0 0.0
    %379 = vmatprep.subr.mxu0 0.0
    %380 = vmatpush1.msra.mxu0 0.0
    %381 = vmatprep.subr.mxu0 0.0
    %382 = vmatpush1.msra.mxu0 0.0
    %383 = vmatprep.subr.mxu0 0.0
    %384 = vmatpush1.msra.mxu0 0.0
    %385 = vmatprep.subr.mxu0 0.0
    %386 = vmatpush1.msra.mxu0 0.0
    %387 = vmatprep.subr.mxu0 0.0
    %388 = vmatpush1.msra.mxu0 0.0
    %389 = vmatprep.mubr.f32.mxu0 0.0
    %390 = vmatmul.mubr.f32.gmra.mrb[0].mxu0 %v323
    %v391 = vpop.f32.mrb[0].mxu0
    %v392 = vadd.f32 %v316, %v391
    %v393 = vpop.f32.mrb[0].mxu0
    %394 = vdwg.mxu0
    %v395 = vlaneseq
    %v396 = vshrl.u32 %v395, 7
    %v397 = vsub.s32 1, %v396
    %v398 = vrot.slane %v43, %v397
    %v399 = vadd.f32 %v392, %v398
    %v400 = vxor.u32 %v399, 2147483648
    %v401 = vmul.f32 %v400, 1.442695
    %v402 = vpow.pop %v401
    %v403 = vadd.f32 %v402, 1.0
    %v404 = vrcp.pop %v403
    %v405 = vmul.f32 1.0, %v404
    %v406 = vtanh.pop %v399
    %408 = vrot.lane.b32.xlu0 %v406, 96
    %v409 = vpop.permute.xlu0 %408
    %v411 = vmul.f32 %v405, %v409
    %v412 = vtanh.pop %v411
    %414 = vrot.lane.b32.xlu0 %v412, 48
    %v415 = vpop.permute.xlu0 %414
    %v417 = vmul.f32 %v405, %v415
    %v418 = vmax.f32 %v399, 0.0
    %v419 = vld [vmem:[#allocation5 + $0x78] sm:$0xff]
    %v420 = vld [vmem:[#allocation5 + $0x80] sm:$0xff]
    %v421 = vld [vmem:[#allocation5 + $0x88] sm:$0xff]
    %v422 = vld [vmem:[#allocation5 + $0x90] sm:$0xff]
    %424 = vrot.lane.b32.xlu0 %v418, 64
    %v425 = vpop.permute.xlu0 %424
    %v426 = vsel %vm322, %v425, 0
    %428 = vmatprep.subr.mxu0 0.0
    %429 = vmatpush1.msra.mxu0 %v421
    %430 = vmatprep.subr.mxu0 0.0
    %431 = vmatpush1.msra.mxu0 %v422
    %432 = vmatprep.subr.mxu0 0.0
    %433 = vmatpush1.msra.mxu0 0.0
    %434 = vmatprep.subr.mxu0 0.0
    %435 = vmatpush1.msra.mxu0 0.0
    %436 = vmatprep.subr.mxu0 0.0
    %437 = vmatpush1.msra.mxu0 0.0
    %438 = vmatprep.subr.mxu0 0.0
    %439 = vmatpush1.msra.mxu0 0.0
    %440 = vmatprep.subr.mxu0 0.0
    %441 = vmatpush1.msra.mxu0 0.0
    %442 = vmatprep.subr.mxu0 0.0
    %443 = vmatpush1.msra.mxu0 0.0
    %444 = vmatprep.subr.mxu0 0.0
    %445 = vmatpush1.msra.mxu0 0.0
    %446 = vmatprep.subr.mxu0 0.0
    %447 = vmatpush1.msra.mxu0 0.0
    %448 = vmatprep.subr.mxu0 0.0
    %449 = vmatpush1.msra.mxu0 0.0
    %450 = vmatprep.subr.mxu0 0.0
    %451 = vmatpush1.msra.mxu0 0.0
    %452 = vmatprep.subr.mxu0 0.0
    %453 = vmatpush1.msra.mxu0 0.0
    %454 = vmatprep.subr.mxu0 0.0
    %455 = vmatpush1.msra.mxu0 0.0
    %456 = vmatprep.subr.mxu0 0.0
    %457 = vmatpush1.msra.mxu0 0.0
    %458 = vmatprep.subr.mxu0 0.0
    %459 = vmatpush1.msra.mxu0 0.0
    %460 = vmatprep.subr.mxu0 0.0
    %461 = vmatpush1.msra.mxu0 0.0
    %462 = vmatprep.subr.mxu0 0.0
    %463 = vmatpush1.msra.mxu0 0.0
    %464 = vmatprep.subr.mxu0 0.0
    %465 = vmatpush1.msra.mxu0 0.0
    %466 = vmatprep.subr.mxu0 0.0
    %467 = vmatpush1.msra.mxu0 0.0
    %468 = vmatprep.subr.mxu0 0.0
    %469 = vmatpush1.msra.mxu0 0.0
    %470 = vmatprep.subr.mxu0 0.0
    %471 = vmatpush1.msra.mxu0 0.0
    %472 = vmatprep.subr.mxu0 0.0
    %473 = vmatpush1.msra.mxu0 0.0
    %474 = vmatprep.subr.mxu0 0.0
    %475 = vmatpush1.msra.mxu0 0.0
    %476 = vmatprep.subr.mxu0 0.0
    %477 = vmatpush1.msra.mxu0 0.0
    %478 = vmatprep.subr.mxu0 0.0
    %479 = vmatpush1.msra.mxu0 0.0
    %480 = vmatprep.subr.mxu0 0.0
    %481 = vmatpush1.msra.mxu0 0.0
    %482 = vmatprep.subr.mxu0 0.0
    %483 = vmatpush1.msra.mxu0 0.0
    %484 = vmatprep.subr.mxu0 0.0
    %485 = vmatpush1.msra.mxu0 0.0
    %486 = vmatprep.subr.mxu0 0.0
    %487 = vmatpush1.msra.mxu0 0.0
    %488 = vmatprep.subr.mxu0 0.0
    %489 = vmatpush1.msra.mxu0 0.0
    %490 = vmatprep.subr.mxu0 0.0
    %491 = vmatpush1.msra.mxu0 0.0
    %492 = vmatprep.mubr.f32.mxu0 0.0
    %493 = vmatmul.mubr.f32.gmra.mrb[0].mxu0 %v426
    %v494 = vpop.f32.mrb[0].mxu0
    %v495 = vadd.f32 0.0, %v494
    %v496 = vpop.f32.mrb[0].mxu0
    %497 = vdwg.mxu0
    %499 = vrot.lane.b32.xlu0 %v417, 80
    %v500 = vpop.permute.xlu0 %499
    %v501 = vsel %vm322, %v500, 0
    %503 = vmatprep.subr.mxu0 0.0
    %504 = vmatpush1.msra.mxu0 %v419
    %505 = vmatprep.subr.mxu0 0.0
    %506 = vmatpush1.msra.mxu0 %v420
    %507 = vmatprep.subr.mxu0 0.0
    %508 = vmatpush1.msra.mxu0 0.0
    %509 = vmatprep.subr.mxu0 0.0
    %510 = vmatpush1.msra.mxu0 0.0
    %511 = vmatprep.subr.mxu0 0.0
    %512 = vmatpush1.msra.mxu0 0.0
    %513 = vmatprep.subr.mxu0 0.0
    %514 = vmatpush1.msra.mxu0 0.0
    %515 = vmatprep.subr.mxu0 0.0
    %516 = vmatpush1.msra.mxu0 0.0
    %517 = vmatprep.subr.mxu0 0.0
    %518 = vmatpush1.msra.mxu0 0.0
    %519 = vmatprep.subr.mxu0 0.0
    %520 = vmatpush1.msra.mxu0 0.0
    %521 = vmatprep.subr.mxu0 0.0
    %522 = vmatpush1.msra.mxu0 0.0
    %523 = vmatprep.subr.mxu0 0.0
    %524 = vmatpush1.msra.mxu0 0.0
    %525 = vmatprep.subr.mxu0 0.0
    %526 = vmatpush1.msra.mxu0 0.0
    %527 = vmatprep.subr.mxu0 0.0
    %528 = vmatpush1.msra.mxu0 0.0
    %529 = vmatprep.subr.mxu0 0.0
    %530 = vmatpush1.msra.mxu0 0.0
    %531 = vmatprep.subr.mxu0 0.0
    %532 = vmatpush1.msra.mxu0 0.0
    %533 = vmatprep.subr.mxu0 0.0
    %534 = vmatpush1.msra.mxu0 0.0
    %535 = vmatprep.subr.mxu0 0.0
    %536 = vmatpush1.msra.mxu0 0.0
    %537 = vmatprep.subr.mxu0 0.0
    %538 = vmatpush1.msra.mxu0 0.0
    %539 = vmatprep.subr.mxu0 0.0
    %540 = vmatpush1.msra.mxu0 0.0
    %541 = vmatprep.subr.mxu0 0.0
    %542 = vmatpush1.msra.mxu0 0.0
    %543 = vmatprep.subr.mxu0 0.0
    %544 = vmatpush1.msra.mxu0 0.0
    %545 = vmatprep.subr.mxu0 0.0
    %546 = vmatpush1.msra.mxu0 0.0
    %547 = vmatprep.subr.mxu0 0.0
    %548 = vmatpush1.msra.mxu0 0.0
    %549 = vmatprep.subr.mxu0 0.0
    %550 = vmatpush1.msra.mxu0 0.0
    %551 = vmatprep.subr.mxu0 0.0
    %552 = vmatpush1.msra.mxu0 0.0
    %553 = vmatprep.subr.mxu0 0.0
    %554 = vmatpush1.msra.mxu0 0.0
    %555 = vmatprep.subr.mxu0 0.0
    %556 = vmatpush1.msra.mxu0 0.0
    %557 = vmatprep.subr.mxu0 0.0
    %558 = vmatpush1.msra.mxu0 0.0
    %559 = vmatprep.subr.mxu0 0.0
    %560 = vmatpush1.msra.mxu0 0.0
    %561 = vmatprep.subr.mxu0 0.0
    %562 = vmatpush1.msra.mxu0 0.0
    %563 = vmatprep.subr.mxu0 0.0
    %564 = vmatpush1.msra.mxu0 0.0
    %565 = vmatprep.subr.mxu0 0.0
    %566 = vmatpush1.msra.mxu0 0.0
    %567 = vmatprep.mubr.f32.mxu0 0.0
    %568 = vmatmul.mubr.f32.gmra.mrb[0].mxu0 %v501
    %v569 = vpop.f32.mrb[0].mxu0
    %v570 = vadd.f32 %v495, %v569
    %v571 = vpop.f32.mrb[0].mxu0
    %572 = vdwg.mxu0
    %v573 = vlaneseq
    %v574 = vshrl.u32 %v573, 7
    %v575 = vsub.s32 2, %v574
    %v576 = vrot.slane %v43, %v575
    %v577 = vadd.f32 %v570, %v576
    %vm578 = vcmask 64512
    %v579 = vsel %vm578, %v577, 0.0
    %580 = vadd.xlane.f32.xlu0 %v579
    %v581 = vpop.xlane.xlu0 %580
    %v582 = vrcp.pop 8.0
    %v583 = vmul.f32 %v581, %v582
    %v584 = vsub.f32 %v577, %v583
    %v585 = vmul.f32 %v584, %v584
    %v586 = vsel %vm578, %v585, 0.0
    %587 = vadd.xlane.f32.xlu0 %v586
    %v588 = vpop.xlane.xlu0 %587
    %v589 = vmul.f32 %v588, %v582
    %v590 = vadd.f32 %v589, 1e-05
    %v591 = vrsqrt.pop %v590
    %v592 = vmul.f32 %v584, %v591
    %v593 = vlaneseq
    %v594 = vshrl.u32 %v593, 7
    %v595 = vsub.s32 4, %v594
    %v596 = vrot.slane %v43, %v595
    %v597 = vmul.f32 %v592, %v596
    %v598 = vlaneseq
    %v599 = vshrl.u32 %v598, 7
    %v600 = vsub.s32 5, %v599
    %v601 = vrot.slane %v43, %v600
    %v602 = vadd.f32 %v597, %v601
    %v603 = vtanh.pop %v602
    %vm604 = vcmp.gt.f32.partialorder %v577, 20.0
    %v605 = vmin.f32 %v577, 20.0
    %v606 = vmul.f32 %v605, 1.442695
    %v607 = vpow.pop %v606
    %v608 = vadd.f32 %v607, 1.0
    %v609 = vlog2.pop %v608
    %v610 = vmul.f32 %v609, 0.6931472
    %v611 = vmul.f32 -0.5, %v607
    %v612 = vadd.f32 %v611, 1.0
    %v613 = vmul.f32 %v612, %v607
    %v614 = vand.u32 2147483647, %v607
    %vm615 = vcmp.lt.f32.partialorder %v614, 0.0004427343
    %v616 = vsel %vm615, %v613, %v610
    %v617 = vsel %vm604, %v577, %v616
    %v618 = vld [vmem:[#allocation5 + $0x98] sm:$0xff]
    %v619 = vlaneseq
    %v620 = vshrl.u32 %v619, 7
    %v621 = vsub.s32 3, %v620
    %v622 = vrot.slane %v43, %v621
    %624 = vrot.lane.b32.xlu0 %v617, 120
    %v625 = vpop.permute.xlu0 %624
    %v626 = vsel %vm578, %v625, 0
    %628 = vmatprep.subr.mxu0 0.0
    %629 = vmatpush1.msra.mxu0 %v618
    %630 = vmatprep.subr.mxu0 0.0
    %631 = vmatpush1.msra.mxu0 0.0
    %632 = vmatprep.subr.mxu0 0.0
    %633 = vmatpush1.msra.mxu0 0.0
    %634 = vmatprep.subr.mxu0 0.0
    %635 = vmatpush1.msra.mxu0 0.0
    %636 = vmatprep.subr.mxu0 0.0
    %637 = vmatpush1.msra.mxu0 0.0
    %638 = vmatprep.subr.mxu0 0.0
    %639 = vmatpush1.msra.mxu0 0.0
    %640 = vmatprep.subr.mxu0 0.0
    %641 = vmatpush1.msra.mxu0 0.0
    %642 = vmatprep.subr.mxu0 0.0
    %643 = vmatpush1.msra.mxu0 0.0
    %644 = vmatprep.subr.mxu0 0.0
    %645 = vmatpush1.msra.mxu0 0.0
    %646 = vmatprep.subr.mxu0 0.0
    %647 = vmatpush1.msra.mxu0 0.0
    %648 = vmatprep.subr.mxu0 0.0
    %649 = vmatpush1.msra.mxu0 0.0
    %650 = vmatprep.subr.mxu0 0.0
    %651 = vmatpush1.msra.mxu0 0.0
    %652 = vmatprep.subr.mxu0 0.0
    %653 = vmatpush1.msra.mxu0 0.0
    %654 = vmatprep.subr.mxu0 0.0
    %655 = vmatpush1.msra.mxu0 0.0
    %656 = vmatprep.subr.mxu0 0.0
    %657 = vmatpush1.msra.mxu0 0.0
    %658 = vmatprep.subr.mxu0 0.0
    %659 = vmatpush1.msra.mxu0 0.0
    %660 = vmatprep.subr.mxu0 0.0
    %661 = vmatpush1.msra.mxu0 0.0
    %662 = vmatprep.subr.mxu0 0.0
    %663 = vmatpush1.msra.mxu0 0.0
    %664 = vmatprep.subr.mxu0 0.0
    %665 = vmatpush1.msra.mxu0 0.0
    %666 = vmatprep.subr.mxu0 0.0
    %667 = vmatpush1.msra.mxu0 0.0
    %668 = vmatprep.subr.mxu0 0.0
    %669 = vmatpush1.msra.mxu0 0.0
    %670 = vmatprep.subr.mxu0 0.0
    %671 = vmatpush1.msra.mxu0 0.0
    %672 = vmatprep.subr.mxu0 0.0
    %673 = vmatpush1.msra.mxu0 0.0
    %674 = vmatprep.subr.mxu0 0.0
    %675 = vmatpush1.msra.mxu0 0.0
    %676 = vmatprep.subr.mxu0 0.0
    %677 = vmatpush1.msra.mxu0 0.0
    %678 = vmatprep.subr.mxu0 0.0
    %679 = vmatpush1.msra.mxu0 0.0
    %680 = vmatprep.subr.mxu0 0.0
    %681 = vmatpush1.msra.mxu0 0.0
    %682 = vmatprep.subr.mxu0 0.0
    %683 = vmatpush1.msra.mxu0 0.0
    %684 = vmatprep.subr.mxu0 0.0
    %685 = vmatpush1.msra.mxu0 0.0
    %686 = vmatprep.subr.mxu0 0.0
    %687 = vmatpush1.msra.mxu0 0.0
    %688 = vmatprep.subr.mxu0 0.0
    %689 = vmatpush1.msra.mxu0 0.0
    %690 = vmatprep.subr.mxu0 0.0
    %691 = vmatpush1.msra.mxu0 0.0
    %692 = vmatprep.mubr.f32.mxu0 0.0
    %693 = vmatmul.mubr.f32.gmra.mrb[0].mxu0 %v626
    %v694 = vpop.f32.mrb[0].mxu0
    %v695 = vadd.f32 %v622, %v694
    %v696 = vpop.f32.mrb[0].mxu0
    %697 = vdwg.mxu0
    %vm698 = vcmp.gt.f32.partialorder %v695, 20.0
    %v699 = vmin.f32 %v695, 20.0
    %v700 = vmul.f32 %v699, 1.442695
    %v701 = vpow.pop %v700
    %v702 = vadd.f32 %v701, 1.0
    %v703 = vlog2.pop %v702
    %v704 = vmul.f32 %v703, 0.6931472
    %v705 = vmul.f32 -0.5, %v701
    %v706 = vadd.f32 %v705, 1.0
    %v707 = vmul.f32 %v706, %v701
    %v708 = vand.u32 2147483647, %v701
    %vm709 = vcmp.lt.f32.partialorder %v708, 0.0004427343
    %v710 = vsel %vm709, %v707, %v704
    %v711 = vsel %vm698, %v695, %v710
    %v712 = vadd.f32 %v711, 1e-06
    %714 = vrot.lane.b32.xlu0 %v712, 8
    %v715 = vpop.permute.xlu0 %714
    %v717 = vsel %vm578, %v603, %v715
    %718 = vst.msk [vmem:[#allocation7] sm:$0xff] %vm322, %v717
    // Predicated region
    $region22: #{tpu_custom_call.1} parent=1 // pred_check
      _
    $region23: #{tpu_custom_call.1} parent=1 // pred_check_branch
      %720 = sbr.rel (0) target = $region25
    $region24: #{tpu_custom_call.1} parent=1 // pred_region
      %s722 = ssub.s32 128, 128
      %723 = vsyncadd [#allocation4], %s722
      %s725 = sshll.u32 [#allocation7], 4
      %s726 = int_to_ptr.vmem [resolvable:$true] %s725
      %728 = dma.vmem_to_hbm [thread:$0]  %s726, 128, %s3, [#allocation4]
    $region25: #{tpu_custom_call.1} parent=1 // pred_fallthru
      _
    // Predicated region
    $region26: #{tpu_custom_call.1} parent=1 // pred_check
      _
    $region27: #{tpu_custom_call.1} parent=1 // pred_check_branch
      %730 = sbr.rel (0) target = $region29
    $region28: #{tpu_custom_call.1} parent=1 // pred_region
      %731 = dma.done [#allocation4], 128
    $region29: #{tpu_custom_call.1} parent=1 // pred_fallthru
      _
    %732 = vsyncpa [#allocation3], 1
    %733 = vsyncpa [#allocation6], 1
    %734 = vsyncpa [#allocation4], 1

</llo_original>
